<compile_context>
chip_gen: v5e
topology: v5e:2x2
jax: 0.10.0
libtpu: 0.0.40
codegen_flags: <defaults>
</compile_context>

<pallas_src>
import jax
import jax.numpy as jnp
from jax.experimental import pallas as pl
from jax.experimental.pallas import tpu as pltpu


def _round_up(x, m):
    return ((x + m - 1) // m) * m


def mlp_kernel(x_ref, w1_ref, b1_ref, w4_ref, b4_ref, o_ref):
    x = x_ref[...]                                            # (TB, F)
    # linear1: (TB, F) @ (F, 32) + (1, 32)
    h = jnp.dot(x, w1_ref[...], preferred_element_type=jnp.float32) + b1_ref[...]
    # LeakyReLU (PyTorch default negative_slope = 0.01)
    h = jnp.where(h >= 0, h, jnp.float32(0.01) * h)
    # linear4: (TB, 32) @ (32, 128) + (1, 128)
    y = jnp.dot(h, w4_ref[...], preferred_element_type=jnp.float32) + b4_ref[...]
    # dropout (eval mode) -> identity
    o_ref[...] = y.astype(o_ref.dtype)


def _mlp_reference(x, w1, b1, w4, b4):
    h = x @ w1 + b1
    h = jnp.where(h >= 0, h, 0.01 * h)
    return h @ w4 + b4


def mlp_forward(x, w1, b1, w4, b4, *, tile_b=4096, min_pallas_batch=256):
    """x: (B, F) f32. w1: (F, 32), b1: (1, 32), w4: (32, 128), b4: (1, 128)."""
    B, F = x.shape
    H1 = w1.shape[1]
    H4 = w4.shape[1]
    assert w1.shape == (F, H1) and b1.shape == (1, H1)
    assert w4.shape == (H1, H4) and b4.shape == (1, H4)

    # Tiny-batch fallback: pallas_call fixed cost (DMA setup, pipeline
    # prologue/epilogue) dominates at very small B; XLA's fused GEMM wins.
    if B < min_pallas_batch:
        return _mlp_reference(x, w1, b1, w4, b4)

    # Batch tile: multiple of 8, and at least 2 grid steps so the "parallel"
    # batch axis can be sharded across both TensorCores on v7x.
    tb = min(tile_b, _round_up(pl.cdiv(B, 2), 8))
    tb = max(8, _round_up(tb, 8))
    grid = (pl.cdiv(B, tb),)  # ragged tail handled by Pallas block masking

    # Honest scheduling hint: actual HBM traffic (no padding round-trips).
    flops = 2 * B * (F * H1 + H1 * H4)
    bytes_accessed = 4 * (B * (F + H4) + F * H1 + H1 + H1 * H4 + H4)

    # VMEM budget: f32, lane-padded to 128 lanes, double-buffered x/out blocks
    # plus h/y temps; weights are negligible. ~3 KiB/row -> ~12 MiB at tb=4096.
    lane = 128
    per_row_bytes = 4 * (2 * lane                    # x block, 2 buffers, lane-padded
                         + 2 * _round_up(H4, lane)   # out block, 2 buffers
                         + _round_up(H1, lane)       # h temp
                         + _round_up(H4, lane))      # y temp
    vmem_limit = min(tb * per_row_bytes + (8 << 20), 48 << 20)

    return pl.pallas_call(
        mlp_kernel,
        out_shape=jax.ShapeDtypeStruct((B, H4), x.dtype),
        grid=grid,
        in_specs=[
            pl.BlockSpec((tb, F), lambda i: (i, 0)),    # x: streamed per tile
            pl.BlockSpec((F, H1), lambda i: (0, 0)),    # W1: resident
            pl.BlockSpec((1, H1), lambda i: (0, 0)),    # b1: resident
            pl.BlockSpec((H1, H4), lambda i: (0, 0)),   # W4: resident
            pl.BlockSpec((1, H4), lambda i: (0, 0)),    # b4: resident
        ],
        out_specs=pl.BlockSpec((tb, H4), lambda i: (i, 0)),
        compiler_params=pltpu.CompilerParams(
            dimension_semantics=("parallel",),
            vmem_limit_bytes=vmem_limit,
        ),
        cost_estimate=pl.CostEstimate(
            flops=flops, transcendentals=0, bytes_accessed=bytes_accessed),
    )(x, w1, b1, w4, b4)


def init_params(key, feature_size):
    """Deterministic PyTorch-style nn.Linear init (uniform +/- 1/sqrt(fan_in))."""
    k1, k2, k3, k4 = jax.random.split(key, 4)

    def linear_init(kw, kb, fan_in, fan_out):
        bound = 1.0 / jnp.sqrt(jnp.float32(fan_in))
        w = jax.random.uniform(kw, (fan_in, fan_out), jnp.float32, -bound, bound)
        b = jax.random.uniform(kb, (1, fan_out), jnp.float32, -bound, bound)
        return w, b

    w1, b1 = linear_init(k1, k2, feature_size, 32)   # linear1
    w4, b4 = linear_init(k3, k4, 32, 128)            # linear4
    return w1, b1, w4, b4


if __name__ == "__main__":
    feature_size = 16
    key = jax.random.PRNGKey(0)
    kx, kp = jax.random.split(key)
    w1, b1, w4, b4 = init_params(kp, feature_size)

    # Pallas path: B=500 -> tb=256, grid=(2,) (megacore-friendly) with a
    # ragged last tile (244 valid rows) exercising the masked-store path.
    batch = 500
    x = jax.random.normal(kx, (batch, feature_size), jnp.float32)
    out = mlp_forward(x, w1, b1, w4, b4)
    jax.block_until_ready(out)
    ref = _mlp_reference(x, w1, b1, w4, b4)
    assert out.shape == (batch, 128)
    assert jnp.allclose(out, ref, atol=1e-5, rtol=1e-5)

    # Tiny-batch fallback path (plain jnp) must match too.
    x_small = jax.random.normal(kx, (8, feature_size), jnp.float32)
    out_small = mlp_forward(x_small, w1, b1, w4, b4)
    jax.block_until_ready(out_small)
    ref_small = _mlp_reference(x_small, w1, b1, w4, b4)
    assert out_small.shape == (8, 128)
    assert jnp.allclose(out_small, ref_small, atol=1e-5, rtol=1e-5)

    print("KERNEL_OK")
</pallas_src>

<mosaic_0001>
module attributes {stable_mosaic.version = 11 : i64} {
  func.func @mlp_kernel(%arg0: i32, %arg1: memref<256x16xf32, #tpu.memory_space<vmem>>, %arg2: memref<16x32xf32, #tpu.memory_space<vmem>>, %arg3: memref<1x32xf32, #tpu.memory_space<vmem>>, %arg4: memref<32x128xf32, #tpu.memory_space<vmem>>, %arg5: memref<1x128xf32, #tpu.memory_space<vmem>>, %arg6: memref<256x128xf32, #tpu.memory_space<vmem>>) attributes {dimension_semantics = [#tpu.dimension_semantics<parallel>], iteration_bounds = array<i64: 2>, scalar_prefetch = 0 : i64, scratch_operands = 0 : i64, tpu.core_type = #tpu.core_type<tc>, window_params = [{transform_indices = @transform_0, window_bounds = array<i64: 256, 16>}, {pipeline_mode = #tpu.pipeline_mode<synchronous>, transform_indices = @transform_1, window_bounds = array<i64: 16, 32>}, {pipeline_mode = #tpu.pipeline_mode<synchronous>, transform_indices = @transform_2, window_bounds = array<i64: 1, 32>}, {pipeline_mode = #tpu.pipeline_mode<synchronous>, transform_indices = @transform_3, window_bounds = array<i64: 32, 128>}, {pipeline_mode = #tpu.pipeline_mode<synchronous>, transform_indices = @transform_4, window_bounds = array<i64: 1, 128>}, {transform_indices = @transform_5, window_bounds = array<i64: 256, 128>}]} {
    %c0 = arith.constant 0 : index
    %c0_0 = arith.constant 0 : index
    %0 = vector.load %arg1[%c0, %c0_0] : memref<256x16xf32, #tpu.memory_space<vmem>>, vector<256x16xf32>
    %c0_1 = arith.constant 0 : index
    %c0_2 = arith.constant 0 : index
    %1 = vector.load %arg2[%c0_1, %c0_2] : memref<16x32xf32, #tpu.memory_space<vmem>>, vector<16x32xf32>
    %cst = arith.constant dense<0.000000e+00> : vector<256x32xf32>
    %2 = tpu.matmul %0, %1, %cst {dimension_numbers = #tpu.dot_dimension_numbers<[1], [0], [0], [1], [0, 0, 1, 1], [], []>} : vector<256x16xf32>, vector<16x32xf32>, vector<256x32xf32> -> vector<256x32xf32>
    %c0_3 = arith.constant 0 : index
    %c0_4 = arith.constant 0 : index
    %3 = vector.load %arg3[%c0_3, %c0_4] : memref<1x32xf32, #tpu.memory_space<vmem>>, vector<1x32xf32>
    %4 = vector.broadcast %3 : vector<1x32xf32> to vector<256x32xf32>
    %5 = arith.addf %2, %4 : vector<256x32xf32>
    %cst_5 = arith.constant 0.000000e+00 : f32
    %6 = vector.broadcast %cst_5 : f32 to vector<256x32xf32>
    %7 = arith.cmpf oge, %5, %6 : vector<256x32xf32>
    %cst_6 = arith.constant 0.00999999977 : f32
    %8 = vector.broadcast %cst_6 : f32 to vector<256x32xf32>
    %9 = arith.mulf %8, %5 : vector<256x32xf32>
    %10 = arith.select %7, %5, %9 : vector<256x32xi1>, vector<256x32xf32>
    %c0_7 = arith.constant 0 : index
    %c0_8 = arith.constant 0 : index
    %11 = vector.load %arg4[%c0_7, %c0_8] : memref<32x128xf32, #tpu.memory_space<vmem>>, vector<32x128xf32>
    %cst_9 = arith.constant dense<0.000000e+00> : vector<256x128xf32>
    %12 = tpu.matmul %10, %11, %cst_9 {dimension_numbers = #tpu.dot_dimension_numbers<[1], [0], [0], [1], [0, 0, 1, 1], [], []>} : vector<256x32xf32>, vector<32x128xf32>, vector<256x128xf32> -> vector<256x128xf32>
    %c0_10 = arith.constant 0 : index
    %c0_11 = arith.constant 0 : index
    %13 = vector.load %arg5[%c0_10, %c0_11] : memref<1x128xf32, #tpu.memory_space<vmem>>, vector<1x128xf32>
    %14 = vector.broadcast %13 : vector<1x128xf32> to vector<256x128xf32>
    %15 = arith.addf %12, %14 : vector<256x128xf32>
    %c0_12 = arith.constant 0 : index
    %c0_13 = arith.constant 0 : index
    %16 = vector.load %arg6[%c0_12, %c0_13] : memref<256x128xf32, #tpu.memory_space<vmem>>, vector<256x128xf32>
    tpu.vector_store %arg6[%c0_12, %c0_13], %15 {strides = array<i32>} : memref<256x128xf32, #tpu.memory_space<vmem>>, vector<256x128xf32>,
    return
  }
  func.func @transform_0(%arg0: i32) -> (i32, i32) {
    %c0_i32 = arith.constant 0 : i32
    %c0_i32_0 = arith.constant 0 : i32
    return %arg0, %c0_i32 : i32, i32
  }
  func.func @transform_1(%arg0: i32) -> (i32, i32) {
    %c0_i32 = arith.constant 0 : i32
    %c0_i32_0 = arith.constant 0 : i32
    %c0_i32_1 = arith.constant 0 : i32
    return %c0_i32, %c0_i32_0 : i32, i32
  }
  func.func @transform_2(%arg0: i32) -> (i32, i32) {
    %c0_i32 = arith.constant 0 : i32
    %c0_i32_0 = arith.constant 0 : i32
    %c0_i32_1 = arith.constant 0 : i32
    return %c0_i32, %c0_i32_0 : i32, i32
  }
  func.func @transform_3(%arg0: i32) -> (i32, i32) {
    %c0_i32 = arith.constant 0 : i32
    %c0_i32_0 = arith.constant 0 : i32
    %c0_i32_1 = arith.constant 0 : i32
    return %c0_i32, %c0_i32_0 : i32, i32
  }
  func.func @transform_4(%arg0: i32) -> (i32, i32) {
    %c0_i32 = arith.constant 0 : i32
    %c0_i32_0 = arith.constant 0 : i32
    %c0_i32_1 = arith.constant 0 : i32
    return %c0_i32, %c0_i32_0 : i32, i32
  }
  func.func @transform_5(%arg0: i32) -> (i32, i32) {
    %c0_i32 = arith.constant 0 : i32
    %c0_i32_0 = arith.constant 0 : i32
    return %arg0, %c0_i32 : i32, i32
  }
}

</mosaic_0001>

<llo_original>
// kernel: tpu_custom_call.1
$region0: #{tpu_custom_call.1}
  #allocation0 [shape = 'u32[]', space=smem, size = 0x4, offset = 0x4, fixed_abs, tag = 'smem constant byte address 0x4 - core index']
  #allocation1 [shape = 'u32[72,128]{1,0:T(1,128)}', space=vmem, size = 0x9000, scoped, tag = 'internal scratch']
  %s0 = inlined_call_operand.vmem [shape: f32[500,16], index: 0, kind: input, shape index: {}]
  %s1 = inlined_call_operand.vmem [shape: f32[16,32], index: 1, kind: input, shape index: {}]
  %s2 = inlined_call_operand.vmem [shape: f32[1,32], index: 2, kind: input, shape index: {}]
  %s3 = inlined_call_operand.vmem [shape: f32[32,128], index: 3, kind: input, shape index: {}]
  %s4 = inlined_call_operand.vmem [shape: f32[1,128], index: 4, kind: input, shape index: {}]
  %s5 = inlined_call_operand.hbm [shape: f32[500,128], index: 5, kind: output, shape index: {}]
  %s6 = sld [smem:[#allocation0]]
  $region53: #{tpu_custom_call.1} parent=0
    _
  %s8 = ssub.s32 1, %s6
  %s9 = scalar_select 0, %s8, %s6
  $region1: #{tpu_custom_call.1} parent=0
    #allocation2 [shape = 'u8[262144]{0}', space=vmem, size = 0x40000, scoped, tag = 'output window, operand 0']
    #allocation3 [shape = 's32[2]{0}', space=sflag, size = 0x8, scoped, tag = 'scoped memory for tpu_custom_call.1']
    %10 = vsyncpa [#allocation3], 0
    %s11 = scalar_lea.sflag [#allocation3], 1
    %12 = vsyncpa %s11, 0
    loop: start=0, step=1, limit=4
    $region2: #{tpu_custom_call.1} parent=1 // loop_pre_header
      _
    $region3: #{tpu_custom_call.1} parent=1 // loop_header
      %s14 = sphi 0, %s18
      %p15 = scmp.ge.s32.totalorder %s14, 4
      %s24 = sphi 0, %s26
      %s27 = sphi 0, %s24
      %s28 = sphi 0, %s27
      %s44 = sphi 0, %s28
      %s48 = sphi 0, %s48
      %s50 = sphi 0, %s48
      %s51 = sphi 0, %s50
      %s65 = sphi 0, %s51
      %s69 = sphi 0, %s69
      %s71 = sphi 0, %s69
      %s72 = sphi 0, %s71
      %s86 = sphi 0, %s72
      %s90 = sphi 0, %s90
      %s92 = sphi 0, %s90
      %s93 = sphi 0, %s92
      %s107 = sphi 0, %s93
      %s111 = sphi 0, %s111
      %s113 = sphi 0, %s111
      %s114 = sphi 0, %s113
      %s128 = sphi 0, %s114
      %s134 = sphi 0, %s136
      %s137 = sphi 0, %s134
      %s138 = sphi 0, %s137
      %s154 = sphi 0, %s138
    $region4: #{tpu_custom_call.1} parent=1 // loop_header_branch
      %17 = sbr.rel (%p15) target = $region8
    $region5: #{tpu_custom_call.1} parent=1 // loop_body
      %s19 = ssub.s32 %s14, 1
      %s20 = ssub.s32 %s14, 2
      %s21 = sadd.s32 %s14, 1
      %s22 = ssub.s32 %s14, %s21
      %p23 = scmp.eq.s32.totalorder %s22, 0
      %s25 = sadd.s32 %s24, 1
      %s26 = scalar_select %p23, %s24, %s25
      %p29 = pneg %p23
      %p30 = scmp.eq.s32.totalorder %s14, 1
      %p31 = por %p29, %p30
      %p32 = scmp.ne.s32.totalorder %s24, %s27
      %p33 = scmp.eq.s32.totalorder %s14, 0
      %p34 = por %p32, %p33
      %p35 = scmp.ne.s32.totalorder %s24, %s27
      %p36 = scmp.eq.s32.totalorder %s19, 1
      %p37 = por %p35, %p36
      %p38 = scmp.ne.s32.totalorder %s27, %s28
      %p39 = scmp.eq.s32.totalorder %s19, 0
      %p40 = por %p38, %p39
      %p41 = scmp.ne.s32.totalorder %s27, %s28
      %p42 = scmp.eq.s32.totalorder %s20, 1
      %p43 = por %p41, %p42
      %p45 = scmp.ne.s32.totalorder %s28, %s44
      %p46 = scmp.eq.s32.totalorder %s20, 0
      %p47 = por %p45, %p46
      %s49 = sadd.s32 %s48, 1
      %p52 = scmp.eq.s32.totalorder %s14, 1
      %p53 = scmp.ne.s32.totalorder %s48, %s50
      %p54 = scmp.eq.s32.totalorder %s14, 0
      %p55 = por %p53, %p54
      %p56 = scmp.ne.s32.totalorder %s48, %s50
      %p57 = scmp.eq.s32.totalorder %s19, 1
      %p58 = por %p56, %p57
      %p59 = scmp.ne.s32.totalorder %s50, %s51
      %p60 = scmp.eq.s32.totalorder %s19, 0
      %p61 = por %p59, %p60
      %p62 = scmp.ne.s32.totalorder %s50, %s51
      %p63 = scmp.eq.s32.totalorder %s20, 1
      %p64 = por %p62, %p63
      %p66 = scmp.ne.s32.totalorder %s51, %s65
      %p67 = scmp.eq.s32.totalorder %s20, 0
      %p68 = por %p66, %p67
      %s70 = sadd.s32 %s69, 1
      %p73 = scmp.eq.s32.totalorder %s14, 1
      %p74 = scmp.ne.s32.totalorder %s69, %s71
      %p75 = scmp.eq.s32.totalorder %s14, 0
      %p76 = por %p74, %p75
      %p77 = scmp.ne.s32.totalorder %s69, %s71
      %p78 = scmp.eq.s32.totalorder %s19, 1
      %p79 = por %p77, %p78
      %p80 = scmp.ne.s32.totalorder %s71, %s72
      %p81 = scmp.eq.s32.totalorder %s19, 0
      %p82 = por %p80, %p81
      %p83 = scmp.ne.s32.totalorder %s71, %s72
      %p84 = scmp.eq.s32.totalorder %s20, 1
      %p85 = por %p83, %p84
      %p87 = scmp.ne.s32.totalorder %s72, %s86
      %p88 = scmp.eq.s32.totalorder %s20, 0
      %p89 = por %p87, %p88
      %s91 = sadd.s32 %s90, 1
      %p94 = scmp.eq.s32.totalorder %s14, 1
      %p95 = scmp.ne.s32.totalorder %s90, %s92
      %p96 = scmp.eq.s32.totalorder %s14, 0
      %p97 = por %p95, %p96
      %p98 = scmp.ne.s32.totalorder %s90, %s92
      %p99 = scmp.eq.s32.totalorder %s19, 1
      %p100 = por %p98, %p99
      %p101 = scmp.ne.s32.totalorder %s92, %s93
      %p102 = scmp.eq.s32.totalorder %s19, 0
      %p103 = por %p101, %p102
      %p104 = scmp.ne.s32.totalorder %s92, %s93
      %p105 = scmp.eq.s32.totalorder %s20, 1
      %p106 = por %p104, %p105
      %p108 = scmp.ne.s32.totalorder %s93, %s107
      %p109 = scmp.eq.s32.totalorder %s20, 0
      %p110 = por %p108, %p109
      %s112 = sadd.s32 %s111, 1
      %p115 = scmp.eq.s32.totalorder %s14, 1
      %p116 = scmp.ne.s32.totalorder %s111, %s113
      %p117 = scmp.eq.s32.totalorder %s14, 0
      %p118 = por %p116, %p117
      %p119 = scmp.ne.s32.totalorder %s111, %s113
      %p120 = scmp.eq.s32.totalorder %s19, 1
      %p121 = por %p119, %p120
      %p122 = scmp.ne.s32.totalorder %s113, %s114
      %p123 = scmp.eq.s32.totalorder %s19, 0
      %p124 = por %p122, %p123
      %p125 = scmp.ne.s32.totalorder %s113, %s114
      %p126 = scmp.eq.s32.totalorder %s20, 1
      %p127 = por %p125, %p126
      %p129 = scmp.ne.s32.totalorder %s114, %s128
      %p130 = scmp.eq.s32.totalorder %s20, 0
      %p131 = por %p129, %p130
      %s132 = ssub.s32 %s14, %s21
      %p133 = scmp.eq.s32.totalorder %s132, 0
      %s135 = sadd.s32 %s134, 1
      %s136 = scalar_select %p133, %s134, %s135
      %p139 = pneg %p133
      %p140 = scmp.eq.s32.totalorder %s14, 1
      %p141 = por %p139, %p140
      %p142 = scmp.ne.s32.totalorder %s134, %s137
      %p143 = scmp.eq.s32.totalorder %s14, 0
      %p144 = por %p142, %p143
      %p145 = scmp.ne.s32.totalorder %s134, %s137
      %p146 = scmp.eq.s32.totalorder %s19, 1
      %p147 = por %p145, %p146
      %p148 = scmp.ne.s32.totalorder %s137, %s138
      %p149 = scmp.eq.s32.totalorder %s19, 0
      %p150 = por %p148, %p149
      %p151 = scmp.ne.s32.totalorder %s137, %s138
      %p152 = scmp.eq.s32.totalorder %s20, 1
      %p153 = por %p151, %p152
      %p155 = scmp.ne.s32.totalorder %s138, %s154
      %p156 = scmp.eq.s32.totalorder %s20, 0
      %p157 = por %p155, %p156
      %p158 = scmp.le.s32.totalorder 1, %s14
      %p159 = scmp.lt.s32.totalorder %s14, 3
      %p160 = pnand %p158, %p159
      %p161 = pneg %p160
      // Predicated region
      $region9: #{tpu_custom_call.1} parent=5 // pred_check
        _
      $region10: #{tpu_custom_call.1} parent=5 // pred_check_branch
        %163 = sbr.rel (%p160) target = $region12
      $region11: #{tpu_custom_call.1} parent=5 // pred_region
        %s164 = ssub.s32 %s14, 1
        // Predicated region
        $region13: #{tpu_custom_call.1} parent=11 // pred_check
          %p165 = pneg %p61
        $region14: #{tpu_custom_call.1} parent=11 // pred_check_branch
          %167 = sbr.rel (%p165) target = $region16
        $region15: #{tpu_custom_call.1} parent=11 // pred_region
          _
        $region16: #{tpu_custom_call.1} parent=11 // pred_fallthru
          _
        // Predicated region
        $region17: #{tpu_custom_call.1} parent=11 // pred_check
          %p168 = pneg %p82
        $region18: #{tpu_custom_call.1} parent=11 // pred_check_branch
          %170 = sbr.rel (%p168) target = $region20
        $region19: #{tpu_custom_call.1} parent=11 // pred_region
          _
        $region20: #{tpu_custom_call.1} parent=11 // pred_fallthru
          _
        // Predicated region
        $region21: #{tpu_custom_call.1} parent=11 // pred_check
          %p171 = pneg %p103
        $region22: #{tpu_custom_call.1} parent=11 // pred_check_branch
          %173 = sbr.rel (%p171) target = $region24
        $region23: #{tpu_custom_call.1} parent=11 // pred_region
          _
        $region24: #{tpu_custom_call.1} parent=11 // pred_fallthru
          _
        // Predicated region
        $region25: #{tpu_custom_call.1} parent=11 // pred_check
          %p174 = pneg %p124
        $region26: #{tpu_custom_call.1} parent=11 // pred_check_branch
          %176 = sbr.rel (%p174) target = $region28
        $region27: #{tpu_custom_call.1} parent=11 // pred_region
          _
        $region28: #{tpu_custom_call.1} parent=11 // pred_fallthru
          _
      $region12: #{tpu_custom_call.1} parent=5 // pred_fallthru
        _
      %p177 = scmp.lt.s32.totalorder %s14, 2
      // Predicated region
      $region29: #{tpu_custom_call.1} parent=5 // pred_check
        %p178 = pneg %p177
      $region30: #{tpu_custom_call.1} parent=5 // pred_check_branch
        %180 = sbr.rel (%p178) target = $region32
      $region31: #{tpu_custom_call.1} parent=5 // pred_region
        // Predicated region
        $region33: #{tpu_custom_call.1} parent=31 // pred_check
          %p181 = pneg %p34
        $region34: #{tpu_custom_call.1} parent=31 // pred_check_branch
          %183 = sbr.rel (%p181) target = $region36
        $region35: #{tpu_custom_call.1} parent=31 // pred_region
          %s184 = smul.u32 32, %s14
          %s185 = ssub.s32 63, %s184
          %p186 = scmp.lt.s32.totalorder %s185, 32
          %s187 = scalar_select %p186, %s185, 32
          %s188 = smul.u32 8, %s187
          %p189 = scmp.lt.s32.totalorder %s184, 62
          %s190 = scalar_select %p189, %s184, 62
          %s191 = smul.addr %s190, 8
          %s192 = scalar_lea.vmem %s0, %s191
          %s193 = smul.u32 32, %s14
          %s194 = ssub.s32 63, %s193
          %p195 = scmp.lt.s32.totalorder %s194, 32
          %s196 = scalar_select %p195, %s194, 32
          %s197 = smul.u32 8, %s196
        $region36: #{tpu_custom_call.1} parent=31 // pred_fallthru
          _
      $region32: #{tpu_custom_call.1} parent=5 // pred_fallthru
        _
      %p198 = scmp.le.s32.totalorder 1, %s14
      %p199 = scmp.lt.s32.totalorder %s14, 3
      %p200 = pnand %p198, %p199
      %p201 = pneg %p200
      // Predicated region
      $region37: #{tpu_custom_call.1} parent=5 // pred_check
        _
      $region38: #{tpu_custom_call.1} parent=5 // pred_check_branch
        %203 = sbr.rel (%p200) target = $region40
      $region39: #{tpu_custom_call.1} parent=5 // pred_region
        %s204 = ssub.s32 %s14, 1
        %s205 = smul.u32 32, %s19
        %s206 = ssub.s32 63, %s205
        %p207 = scmp.lt.s32.totalorder %s206, 32
        %s208 = scalar_select %p207, %s206, 32
        %s209 = smul.u32 8, %s208
        %p210 = scmp.lt.s32.totalorder %s205, 62
        %s211 = scalar_select %p210, %s205, 62
        %s212 = smul.addr %s211, 8
        %s213 = scalar_lea.vmem %s0, %s212
        %p214 = pneg %p40
        %p215 = pneg %p37
        %p216 = pneg %p61
        %p217 = pneg %p58
        %p218 = pneg %p82
        %p219 = pneg %p79
        %p220 = pneg %p103
        %p221 = pneg %p100
        %p222 = pneg %p124
        %p223 = pneg %p121
        %p224 = pneg %p150
        %p225 = pneg %p147
        %s226 = sand.u32 %s137, 1
        %s227 = scalar_lea.sflag [#allocation3], %s226
        %s228 = sand.u32 %s137, 1
        %s229 = smul.addr %s228, 256
        %s230 = scalar_lea.vmem [#allocation2], %s229
        %s231 = smul.u32 32, %s19
        %s232 = ssub.s32 63, %s231
        %p233 = scmp.lt.s32.totalorder %s232, 32
        %s234 = scalar_select %p233, %s232, 32
        %s235 = smul.u32 8, %s234
        %p236 = scmp.lt.s32.totalorder %s231, 62
        %s237 = scalar_select %p236, %s231, 62
        %s238 = smul.addr %s237, 8
        %s239 = scalar_lea.vmem %s0, %s238
        %s240 = smul.u32 32, %s19
        %s241 = ssub.s32 63, %s240
        %p242 = scmp.lt.s32.totalorder %s241, 32
        %s243 = scalar_select %p242, %s241, 32
        %s244 = smul.u32 8, %s243
        %s245 = smul.u32 32, %s19
        %s246 = ssub.s32 63, %s245
        %p247 = scmp.lt.s32.totalorder %s246, 32
        %s248 = scalar_select %p247, %s246, 32
        %s249 = smul.u32 8, %s248
        %v250 = vld [vmem:[%s239] sm:$0xff]
        %v251 = vld [vmem:[%s239 + $0x8] sm:$0xff]
        %v252 = vld [vmem:[%s239 + $0x10] sm:$0xff]
        %v253 = vld [vmem:[%s239 + $0x18] sm:$0xff]
        %v254 = vld [vmem:[%s239 + $0x20] sm:$0xff]
        %v255 = vld [vmem:[%s239 + $0x28] sm:$0xff]
        %v256 = vld [vmem:[%s239 + $0x30] sm:$0xff]
        %v257 = vld [vmem:[%s239 + $0x38] sm:$0xff]
        %v258 = vld [vmem:[%s239 + $0x40] sm:$0xff]
        %v259 = vld [vmem:[%s239 + $0x48] sm:$0xff]
        %v260 = vld [vmem:[%s239 + $0x50] sm:$0xff]
        %v261 = vld [vmem:[%s239 + $0x58] sm:$0xff]
        %v262 = vld [vmem:[%s239 + $0x60] sm:$0xff]
        %v263 = vld [vmem:[%s239 + $0x68] sm:$0xff]
        %v264 = vld [vmem:[%s239 + $0x70] sm:$0xff]
        %v265 = vld [vmem:[%s239 + $0x78] sm:$0xff]
        %v266 = vld [vmem:[%s239 + $0x80] sm:$0xff]
        %v267 = vld [vmem:[%s239 + $0x88] sm:$0xff]
        %v268 = vld [vmem:[%s239 + $0x90] sm:$0xff]
        %v269 = vld [vmem:[%s239 + $0x98] sm:$0xff]
        %v270 = vld [vmem:[%s239 + $0xa0] sm:$0xff]
        %v271 = vld [vmem:[%s239 + $0xa8] sm:$0xff]
        %v272 = vld [vmem:[%s239 + $0xb0] sm:$0xff]
        %v273 = vld [vmem:[%s239 + $0xb8] sm:$0xff]
        %v274 = vld [vmem:[%s239 + $0xc0] sm:$0xff]
        %v275 = vld [vmem:[%s239 + $0xc8] sm:$0xff]
        %v276 = vld [vmem:[%s239 + $0xd0] sm:$0xff]
        %v277 = vld [vmem:[%s239 + $0xd8] sm:$0xff]
        %v278 = vld [vmem:[%s239 + $0xe0] sm:$0xff]
        %v279 = vld [vmem:[%s239 + $0xe8] sm:$0xff]
        %v280 = vld [vmem:[%s239 + $0xf0] sm:$0xff]
        %v281 = vld [vmem:[%s239 + $0xf8] sm:$0xff]
        %v282 = vld [vmem:[%s1] sm:$0xff]
        %v283 = vld [vmem:[%s1 + $0x8] sm:$0xff]
        %v284 = vld [vmem:[%s2] sm:$0x1]
        %v286 = vperm.slane %v284, 0
        %vm288 = vcmask 130048
        %v290 = vsel %vm288, %v250, 0
        %v293 = vsel %vm288, %v251, 0
        %v296 = vsel %vm288, %v252, 0
        %v299 = vsel %vm288, %v253, 0
        %v302 = vsel %vm288, %v254, 0
        %v305 = vsel %vm288, %v255, 0
        %v308 = vsel %vm288, %v256, 0
        %v311 = vsel %vm288, %v257, 0
        %v314 = vsel %vm288, %v258, 0
        %v317 = vsel %vm288, %v259, 0
        %v320 = vsel %vm288, %v260, 0
        %v323 = vsel %vm288, %v261, 0
        %v326 = vsel %vm288, %v262, 0
        %v329 = vsel %vm288, %v263, 0
        %v332 = vsel %vm288, %v264, 0
        %v335 = vsel %vm288, %v265, 0
        %v338 = vsel %vm288, %v266, 0
        %v341 = vsel %vm288, %v267, 0
        %v344 = vsel %vm288, %v268, 0
        %v347 = vsel %vm288, %v269, 0
        %v350 = vsel %vm288, %v270, 0
        %v353 = vsel %vm288, %v271, 0
        %v356 = vsel %vm288, %v272, 0
        %v359 = vsel %vm288, %v273, 0
        %v362 = vsel %vm288, %v274, 0
        %v365 = vsel %vm288, %v275, 0
        %v368 = vsel %vm288, %v276, 0
        %v371 = vsel %vm288, %v277, 0
        %v374 = vsel %vm288, %v278, 0
        %v377 = vsel %vm288, %v279, 0
        %v380 = vsel %vm288, %v280, 0
        %v383 = vsel %vm288, %v281, 0
        %385 = vmatpush.msra.mxu0 0.0
        %386 = vmatpush.msra.mxu0 0.0
        %387 = vmatpush.msra.mxu0 0.0
        %388 = vmatpush.msra.mxu0 0.0
        %389 = vmatpush.msra.mxu0 0.0
        %390 = vmatpush.msra.mxu0 0.0
        %391 = vmatpush.msra.mxu0 0.0
        %392 = vmatpush.msra.mxu0 0.0
        %393 = vmatpush.msra.mxu0 0.0
        %394 = vmatpush.msra.mxu0 0.0
        %395 = vmatpush.msra.mxu0 0.0
        %396 = vmatpush.msra.mxu0 0.0
        %397 = vmatpush.msra.mxu0 0.0
        %398 = vmatpush.msra.mxu0 0.0
        %399 = vmatpush.msra.mxu0 %v283
        %400 = vmatpush.msra.mxu0 %v282
        %401 = vmatmul.f32.gmra.mxu0 %v290
        %v402 = vpop.f32.mrf.mxu0
        %v403 = vadd.f32 %v286, %v402
        %404 = vmatmul.f32.gmra.mxu0 %v293
        %v405 = vpop.f32.mrf.mxu0
        %v406 = vadd.f32 %v286, %v405
        %407 = vmatmul.f32.gmra.mxu0 %v296
        %v408 = vpop.f32.mrf.mxu0
        %v409 = vadd.f32 %v286, %v408
        %410 = vmatmul.f32.gmra.mxu0 %v299
        %v411 = vpop.f32.mrf.mxu0
        %v412 = vadd.f32 %v286, %v411
        %413 = vmatmul.f32.gmra.mxu0 %v302
        %v414 = vpop.f32.mrf.mxu0
        %v415 = vadd.f32 %v286, %v414
        %416 = vmatmul.f32.gmra.mxu0 %v305
        %v417 = vpop.f32.mrf.mxu0
        %v418 = vadd.f32 %v286, %v417
        %419 = vmatmul.f32.gmra.mxu0 %v308
        %v420 = vpop.f32.mrf.mxu0
        %v421 = vadd.f32 %v286, %v420
        %422 = vmatmul.f32.gmra.mxu0 %v311
        %v423 = vpop.f32.mrf.mxu0
        %v424 = vadd.f32 %v286, %v423
        %425 = vmatmul.f32.gmra.mxu0 %v314
        %v426 = vpop.f32.mrf.mxu0
        %v427 = vadd.f32 %v286, %v426
        %428 = vmatmul.f32.gmra.mxu0 %v317
        %v429 = vpop.f32.mrf.mxu0
        %v430 = vadd.f32 %v286, %v429
        %431 = vmatmul.f32.gmra.mxu0 %v320
        %v432 = vpop.f32.mrf.mxu0
        %v433 = vadd.f32 %v286, %v432
        %434 = vmatmul.f32.gmra.mxu0 %v323
        %v435 = vpop.f32.mrf.mxu0
        %v436 = vadd.f32 %v286, %v435
        %437 = vmatmul.f32.gmra.mxu0 %v326
        %v438 = vpop.f32.mrf.mxu0
        %v439 = vadd.f32 %v286, %v438
        %440 = vmatmul.f32.gmra.mxu0 %v329
        %v441 = vpop.f32.mrf.mxu0
        %v442 = vadd.f32 %v286, %v441
        %443 = vmatmul.f32.gmra.mxu0 %v332
        %v444 = vpop.f32.mrf.mxu0
        %v445 = vadd.f32 %v286, %v444
        %446 = vmatmul.f32.gmra.mxu0 %v335
        %v447 = vpop.f32.mrf.mxu0
        %v448 = vadd.f32 %v286, %v447
        %449 = vmatmul.f32.gmra.mxu0 %v338
        %v450 = vpop.f32.mrf.mxu0
        %v451 = vadd.f32 %v286, %v450
        %452 = vmatmul.f32.gmra.mxu0 %v341
        %v453 = vpop.f32.mrf.mxu0
        %v454 = vadd.f32 %v286, %v453
        %455 = vmatmul.f32.gmra.mxu0 %v344
        %v456 = vpop.f32.mrf.mxu0
        %v457 = vadd.f32 %v286, %v456
        %458 = vmatmul.f32.gmra.mxu0 %v347
        %v459 = vpop.f32.mrf.mxu0
        %v460 = vadd.f32 %v286, %v459
        %461 = vmatmul.f32.gmra.mxu0 %v350
        %v462 = vpop.f32.mrf.mxu0
        %v463 = vadd.f32 %v286, %v462
        %464 = vmatmul.f32.gmra.mxu0 %v353
        %v465 = vpop.f32.mrf.mxu0
        %v466 = vadd.f32 %v286, %v465
        %467 = vmatmul.f32.gmra.mxu0 %v356
        %v468 = vpop.f32.mrf.mxu0
        %v469 = vadd.f32 %v286, %v468
        %470 = vmatmul.f32.gmra.mxu0 %v359
        %v471 = vpop.f32.mrf.mxu0
        %v472 = vadd.f32 %v286, %v471
        %473 = vmatmul.f32.gmra.mxu0 %v362
        %v474 = vpop.f32.mrf.mxu0
        %v475 = vadd.f32 %v286, %v474
        %476 = vmatmul.f32.gmra.mxu0 %v365
        %v477 = vpop.f32.mrf.mxu0
        %v478 = vadd.f32 %v286, %v477
        %479 = vmatmul.f32.gmra.mxu0 %v368
        %v480 = vpop.f32.mrf.mxu0
        %v481 = vadd.f32 %v286, %v480
        %482 = vmatmul.f32.gmra.mxu0 %v371
        %v483 = vpop.f32.mrf.mxu0
        %v484 = vadd.f32 %v286, %v483
        %485 = vmatmul.f32.gmra.mxu0 %v374
        %v486 = vpop.f32.mrf.mxu0
        %v487 = vadd.f32 %v286, %v486
        %488 = vmatmul.f32.gmra.mxu0 %v377
        %v489 = vpop.f32.mrf.mxu0
        %v490 = vadd.f32 %v286, %v489
        %491 = vmatmul.f32.gmra.mxu0 %v380
        %v492 = vpop.f32.mrf.mxu0
        %v493 = vadd.f32 %v286, %v492
        %494 = vmatmul.f32.gmra.mxu0 %v383
        %v495 = vpop.f32.mrf.mxu0
        %v496 = vadd.f32 %v286, %v495
        %497 = vdwg.mxu0
        %vm498 = vcmp.ge.f32.partialorder %v403, 0.0
        %vm499 = vcmp.ge.f32.partialorder %v406, 0.0
        %vm500 = vcmp.ge.f32.partialorder %v409, 0.0
        %vm501 = vcmp.ge.f32.partialorder %v412, 0.0
        %vm502 = vcmp.ge.f32.partialorder %v415, 0.0
        %vm503 = vcmp.ge.f32.partialorder %v418, 0.0
        %vm504 = vcmp.ge.f32.partialorder %v421, 0.0
        %vm505 = vcmp.ge.f32.partialorder %v424, 0.0
        %vm506 = vcmp.ge.f32.partialorder %v427, 0.0
        %vm507 = vcmp.ge.f32.partialorder %v430, 0.0
        %vm508 = vcmp.ge.f32.partialorder %v433, 0.0
        %vm509 = vcmp.ge.f32.partialorder %v436, 0.0
        %vm510 = vcmp.ge.f32.partialorder %v439, 0.0
        %vm511 = vcmp.ge.f32.partialorder %v442, 0.0
        %vm512 = vcmp.ge.f32.partialorder %v445, 0.0
        %vm513 = vcmp.ge.f32.partialorder %v448, 0.0
        %vm514 = vcmp.ge.f32.partialorder %v451, 0.0
        %vm515 = vcmp.ge.f32.partialorder %v454, 0.0
        %vm516 = vcmp.ge.f32.partialorder %v457, 0.0
        %vm517 = vcmp.ge.f32.partialorder %v460, 0.0
        %vm518 = vcmp.ge.f32.partialorder %v463, 0.0
        %vm519 = vcmp.ge.f32.partialorder %v466, 0.0
        %vm520 = vcmp.ge.f32.partialorder %v469, 0.0
        %vm521 = vcmp.ge.f32.partialorder %v472, 0.0
        %vm522 = vcmp.ge.f32.partialorder %v475, 0.0
        %vm523 = vcmp.ge.f32.partialorder %v478, 0.0
        %vm524 = vcmp.ge.f32.partialorder %v481, 0.0
        %vm525 = vcmp.ge.f32.partialorder %v484, 0.0
        %vm526 = vcmp.ge.f32.partialorder %v487, 0.0
        %vm527 = vcmp.ge.f32.partialorder %v490, 0.0
        %vm528 = vcmp.ge.f32.partialorder %v493, 0.0
        %vm529 = vcmp.ge.f32.partialorder %v496, 0.0
        %v530 = vmul.f32 %v403, 0.01
        %v531 = vmul.f32 %v406, 0.01
        %v532 = vmul.f32 %v409, 0.01
        %v533 = vmul.f32 %v412, 0.01
        %v534 = vmul.f32 %v415, 0.01
        %v535 = vmul.f32 %v418, 0.01
        %v536 = vmul.f32 %v421, 0.01
        %v537 = vmul.f32 %v424, 0.01
        %v538 = vmul.f32 %v427, 0.01
        %v539 = vmul.f32 %v430, 0.01
        %v540 = vmul.f32 %v433, 0.01
        %v541 = vmul.f32 %v436, 0.01
        %v542 = vmul.f32 %v439, 0.01
        %v543 = vmul.f32 %v442, 0.01
        %v544 = vmul.f32 %v445, 0.01
        %v545 = vmul.f32 %v448, 0.01
        %v546 = vmul.f32 %v451, 0.01
        %v547 = vmul.f32 %v454, 0.01
        %v548 = vmul.f32 %v457, 0.01
        %v549 = vmul.f32 %v460, 0.01
        %v550 = vmul.f32 %v463, 0.01
        %v551 = vmul.f32 %v466, 0.01
        %v552 = vmul.f32 %v469, 0.01
        %v553 = vmul.f32 %v472, 0.01
        %v554 = vmul.f32 %v475, 0.01
        %v555 = vmul.f32 %v478, 0.01
        %v556 = vmul.f32 %v481, 0.01
        %v557 = vmul.f32 %v484, 0.01
        %v558 = vmul.f32 %v487, 0.01
        %v559 = vmul.f32 %v490, 0.01
        %v560 = vmul.f32 %v493, 0.01
        %v561 = vmul.f32 %v496, 0.01
        %v562 = vsel %vm498, %v403, %v530
        %v563 = vsel %vm499, %v406, %v531
        %v564 = vsel %vm500, %v409, %v532
        %v565 = vsel %vm501, %v412, %v533
        %v566 = vsel %vm502, %v415, %v534
        %v567 = vsel %vm503, %v418, %v535
        %v568 = vsel %vm504, %v421, %v536
        %v569 = vsel %vm505, %v424, %v537
        %v570 = vsel %vm506, %v427, %v538
        %v571 = vsel %vm507, %v430, %v539
        %v572 = vsel %vm508, %v433, %v540
        %v573 = vsel %vm509, %v436, %v541
        %v574 = vsel %vm510, %v439, %v542
        %v575 = vsel %vm511, %v442, %v543
        %v576 = vsel %vm512, %v445, %v544
        %v577 = vsel %vm513, %v448, %v545
        %v578 = vsel %vm514, %v451, %v546
        %v579 = vsel %vm515, %v454, %v547
        %v580 = vsel %vm516, %v457, %v548
        %v581 = vsel %vm517, %v460, %v549
        %v582 = vsel %vm518, %v463, %v550
        %v583 = vsel %vm519, %v466, %v551
        %v584 = vsel %vm520, %v469, %v552
        %v585 = vsel %vm521, %v472, %v553
        %v586 = vsel %vm522, %v475, %v554
        %v587 = vsel %vm523, %v478, %v555
        %v588 = vsel %vm524, %v481, %v556
        %v589 = vsel %vm525, %v484, %v557
        %v590 = vsel %vm526, %v487, %v558
        %v591 = vsel %vm527, %v490, %v559
        %v592 = vsel %vm528, %v493, %v560
        %v593 = vsel %vm529, %v496, %v561
        %v594 = vld [vmem:[%s3] sm:$0xff]
        %v595 = vld [vmem:[%s3 + $0x8] sm:$0xff]
        %v596 = vld [vmem:[%s3 + $0x10] sm:$0xff]
        %v597 = vld [vmem:[%s3 + $0x18] sm:$0xff]
        %v598 = vld [vmem:[%s4] sm:$0x1]
        %v600 = vperm.slane %v598, 0
        %vm602 = vcmask 261120
        %v604 = vsel %vm602, %v562, 0
        %v607 = vsel %vm602, %v563, 0
        %v610 = vsel %vm602, %v564, 0
        %v613 = vsel %vm602, %v565, 0
        %v616 = vsel %vm602, %v566, 0
        %v619 = vsel %vm602, %v567, 0
        %v622 = vsel %vm602, %v568, 0
        %v625 = vsel %vm602, %v569, 0
        %v628 = vsel %vm602, %v570, 0
        %v631 = vsel %vm602, %v571, 0
        %v634 = vsel %vm602, %v572, 0
        %v637 = vsel %vm602, %v573, 0
        %v640 = vsel %vm602, %v574, 0
        %v643 = vsel %vm602, %v575, 0
        %v646 = vsel %vm602, %v576, 0
        %v649 = vsel %vm602, %v577, 0
        %v652 = vsel %vm602, %v578, 0
        %v655 = vsel %vm602, %v579, 0
        %v658 = vsel %vm602, %v580, 0
        %v661 = vsel %vm602, %v581, 0
        %v664 = vsel %vm602, %v582, 0
        %v667 = vsel %vm602, %v583, 0
        %v670 = vsel %vm602, %v584, 0
        %v673 = vsel %vm602, %v585, 0
        %v676 = vsel %vm602, %v586, 0
        %v679 = vsel %vm602, %v587, 0
        %v682 = vsel %vm602, %v588, 0
        %v685 = vsel %vm602, %v589, 0
        %v688 = vsel %vm602, %v590, 0
        %v691 = vsel %vm602, %v591, 0
        %v694 = vsel %vm602, %v592, 0
        %v697 = vsel %vm602, %v593, 0
        %699 = vmatpush.msra.mxu0 0.0
        %700 = vmatpush.msra.mxu0 0.0
        %701 = vmatpush.msra.mxu0 0.0
        %702 = vmatpush.msra.mxu0 0.0
        %703 = vmatpush.msra.mxu0 0.0
        %704 = vmatpush.msra.mxu0 0.0
        %705 = vmatpush.msra.mxu0 0.0
        %706 = vmatpush.msra.mxu0 0.0
        %707 = vmatpush.msra.mxu0 0.0
        %708 = vmatpush.msra.mxu0 0.0
        %709 = vmatpush.msra.mxu0 0.0
        %710 = vmatpush.msra.mxu0 0.0
        %711 = vmatpush.msra.mxu0 %v597
        %712 = vmatpush.msra.mxu0 %v596
        %713 = vmatpush.msra.mxu0 %v595
        %714 = vmatpush.msra.mxu0 %v594
        %715 = vmatmul.f32.gmra.mxu0 %v604
        %v716 = vpop.f32.mrf.mxu0
        %v717 = vadd.f32 %v600, %v716
        %718 = vmatmul.f32.gmra.mxu0 %v607
        %v719 = vpop.f32.mrf.mxu0
        %v720 = vadd.f32 %v600, %v719
        %721 = vmatmul.f32.gmra.mxu0 %v610
        %v722 = vpop.f32.mrf.mxu0
        %v723 = vadd.f32 %v600, %v722
        %724 = vmatmul.f32.gmra.mxu0 %v613
        %v725 = vpop.f32.mrf.mxu0
        %v726 = vadd.f32 %v600, %v725
        %727 = vmatmul.f32.gmra.mxu0 %v616
        %v728 = vpop.f32.mrf.mxu0
        %v729 = vadd.f32 %v600, %v728
        %730 = vmatmul.f32.gmra.mxu0 %v619
        %v731 = vpop.f32.mrf.mxu0
        %v732 = vadd.f32 %v600, %v731
        %733 = vmatmul.f32.gmra.mxu0 %v622
        %v734 = vpop.f32.mrf.mxu0
        %v735 = vadd.f32 %v600, %v734
        %736 = vmatmul.f32.gmra.mxu0 %v625
        %v737 = vpop.f32.mrf.mxu0
        %v738 = vadd.f32 %v600, %v737
        %739 = vmatmul.f32.gmra.mxu0 %v628
        %v740 = vpop.f32.mrf.mxu0
        %v741 = vadd.f32 %v600, %v740
        %742 = vmatmul.f32.gmra.mxu0 %v631
        %v743 = vpop.f32.mrf.mxu0
        %v744 = vadd.f32 %v600, %v743
        %745 = vmatmul.f32.gmra.mxu0 %v634
        %v746 = vpop.f32.mrf.mxu0
        %v747 = vadd.f32 %v600, %v746
        %748 = vmatmul.f32.gmra.mxu0 %v637
        %v749 = vpop.f32.mrf.mxu0
        %v750 = vadd.f32 %v600, %v749
        %751 = vmatmul.f32.gmra.mxu0 %v640
        %v752 = vpop.f32.mrf.mxu0
        %v753 = vadd.f32 %v600, %v752
        %754 = vmatmul.f32.gmra.mxu0 %v643
        %v755 = vpop.f32.mrf.mxu0
        %v756 = vadd.f32 %v600, %v755
        %757 = vmatmul.f32.gmra.mxu0 %v646
        %v758 = vpop.f32.mrf.mxu0
        %v759 = vadd.f32 %v600, %v758
        %760 = vmatmul.f32.gmra.mxu0 %v649
        %v761 = vpop.f32.mrf.mxu0
        %v762 = vadd.f32 %v600, %v761
        %763 = vmatmul.f32.gmra.mxu0 %v652
        %v764 = vpop.f32.mrf.mxu0
        %v765 = vadd.f32 %v600, %v764
        %766 = vmatmul.f32.gmra.mxu0 %v655
        %v767 = vpop.f32.mrf.mxu0
        %v768 = vadd.f32 %v600, %v767
        %769 = vmatmul.f32.gmra.mxu0 %v658
        %v770 = vpop.f32.mrf.mxu0
        %v771 = vadd.f32 %v600, %v770
        %772 = vmatmul.f32.gmra.mxu0 %v661
        %v773 = vpop.f32.mrf.mxu0
        %v774 = vadd.f32 %v600, %v773
        %775 = vmatmul.f32.gmra.mxu0 %v664
        %v776 = vpop.f32.mrf.mxu0
        %v777 = vadd.f32 %v600, %v776
        %778 = vmatmul.f32.gmra.mxu0 %v667
        %v779 = vpop.f32.mrf.mxu0
        %v780 = vadd.f32 %v600, %v779
        %781 = vmatmul.f32.gmra.mxu0 %v670
        %v782 = vpop.f32.mrf.mxu0
        %v783 = vadd.f32 %v600, %v782
        %784 = vmatmul.f32.gmra.mxu0 %v673
        %v785 = vpop.f32.mrf.mxu0
        %v786 = vadd.f32 %v600, %v785
        %787 = vmatmul.f32.gmra.mxu0 %v676
        %v788 = vpop.f32.mrf.mxu0
        %v789 = vadd.f32 %v600, %v788
        %790 = vmatmul.f32.gmra.mxu0 %v679
        %v791 = vpop.f32.mrf.mxu0
        %v792 = vadd.f32 %v600, %v791
        %793 = vmatmul.f32.gmra.mxu0 %v682
        %v794 = vpop.f32.mrf.mxu0
        %v795 = vadd.f32 %v600, %v794
        %796 = vmatmul.f32.gmra.mxu0 %v685
        %v797 = vpop.f32.mrf.mxu0
        %v798 = vadd.f32 %v600, %v797
        %799 = vmatmul.f32.gmra.mxu0 %v688
        %v800 = vpop.f32.mrf.mxu0
        %v801 = vadd.f32 %v600, %v800
        %802 = vmatmul.f32.gmra.mxu0 %v691
        %v803 = vpop.f32.mrf.mxu0
        %v804 = vadd.f32 %v600, %v803
        %805 = vmatmul.f32.gmra.mxu0 %v694
        %v806 = vpop.f32.mrf.mxu0
        %v807 = vadd.f32 %v600, %v806
        %808 = vmatmul.f32.gmra.mxu0 %v697
        %v809 = vpop.f32.mrf.mxu0
        %v810 = vadd.f32 %v600, %v809
        %811 = vdwg.mxu0
        %812 = vst [vmem:[%s230] sm:$0xff] %v717
        %813 = vst [vmem:[%s230 + $0x8] sm:$0xff] %v720
        %814 = vst [vmem:[%s230 + $0x10] sm:$0xff] %v723
        %815 = vst [vmem:[%s230 + $0x18] sm:$0xff] %v726
        %816 = vst [vmem:[%s230 + $0x20] sm:$0xff] %v729
        %817 = vst [vmem:[%s230 + $0x28] sm:$0xff] %v732
        %818 = vst [vmem:[%s230 + $0x30] sm:$0xff] %v735
        %819 = vst [vmem:[%s230 + $0x38] sm:$0xff] %v738
        %820 = vst [vmem:[%s230 + $0x40] sm:$0xff] %v741
        %821 = vst [vmem:[%s230 + $0x48] sm:$0xff] %v744
        %822 = vst [vmem:[%s230 + $0x50] sm:$0xff] %v747
        %823 = vst [vmem:[%s230 + $0x58] sm:$0xff] %v750
        %824 = vst [vmem:[%s230 + $0x60] sm:$0xff] %v753
        %825 = vst [vmem:[%s230 + $0x68] sm:$0xff] %v756
        %826 = vst [vmem:[%s230 + $0x70] sm:$0xff] %v759
        %827 = vst [vmem:[%s230 + $0x78] sm:$0xff] %v762
        %828 = vst [vmem:[%s230 + $0x80] sm:$0xff] %v765
        %829 = vst [vmem:[%s230 + $0x88] sm:$0xff] %v768
        %830 = vst [vmem:[%s230 + $0x90] sm:$0xff] %v771
        %831 = vst [vmem:[%s230 + $0x98] sm:$0xff] %v774
        %832 = vst [vmem:[%s230 + $0xa0] sm:$0xff] %v777
        %833 = vst [vmem:[%s230 + $0xa8] sm:$0xff] %v780
        %834 = vst [vmem:[%s230 + $0xb0] sm:$0xff] %v783
        %835 = vst [vmem:[%s230 + $0xb8] sm:$0xff] %v786
        %836 = vst [vmem:[%s230 + $0xc0] sm:$0xff] %v789
        %837 = vst [vmem:[%s230 + $0xc8] sm:$0xff] %v792
        %838 = vst [vmem:[%s230 + $0xd0] sm:$0xff] %v795
        %839 = vst [vmem:[%s230 + $0xd8] sm:$0xff] %v798
        %840 = vst [vmem:[%s230 + $0xe0] sm:$0xff] %v801
        %841 = vst [vmem:[%s230 + $0xe8] sm:$0xff] %v804
        %842 = vst [vmem:[%s230 + $0xf0] sm:$0xff] %v807
        %843 = vst [vmem:[%s230 + $0xf8] sm:$0xff] %v810
        %s844 = sand.u32 %s137, 1
        %s845 = scalar_lea.sflag [#allocation3], %s844
        %s846 = sand.u32 %s137, 1
        %s847 = smul.addr %s846, 256
        %s848 = scalar_lea.vmem [#allocation2], %s847
        // Predicated region
        $region41: #{tpu_custom_call.1} parent=39 // pred_check
          %p849 = pneg %p147
        $region42: #{tpu_custom_call.1} parent=39 // pred_check_branch
          %851 = sbr.rel (%p849) target = $region44
        $region43: #{tpu_custom_call.1} parent=39 // pred_region
          %s852 = smul.u32 32, %s19
          %s853 = ssub.s32 63, %s852
          %p854 = scmp.lt.s32.totalorder %s853, 32
          %s855 = scalar_select %p854, %s853, 32
          %s856 = smul.u32 8, %s855
          %s857 = ssub.s32 256, %s856
          %s858 = sshll.u32 %s857, 4
          %859 = vsyncadd %s845, %s858
          %p860 = scmp.ne.s32.totalorder 0, %s856
          %s861 = smul.addr %s852, 8
          %s862 = scalar_lea.hbm %s5, %s861
          %s863 = smul.u32 8, %s855
          %s864 = sshll.u32 %s848, 4
          %s865 = int_to_ptr.vmem [resolvable:$true] %s864
          %s866 = sshll.u32 %s862, 4
          %s867 = int_to_ptr.hbm [resolvable:$true] %s866
          %s868 = sshll.u32 %s863, 4
          %872 = dma.vmem_to_hbm [thread:$0]  (%p860), %s865, %s868, %s867, %s845, 128, 128, 8
        $region44: #{tpu_custom_call.1} parent=39 // pred_fallthru
          _
      $region40: #{tpu_custom_call.1} parent=5 // pred_fallthru
        _
      %p873 = scmp.le.s32.totalorder 2, %s14
      // Predicated region
      $region45: #{tpu_custom_call.1} parent=5 // pred_check
        %p874 = pneg %p873
      $region46: #{tpu_custom_call.1} parent=5 // pred_check_branch
        %876 = sbr.rel (%p874) target = $region48
      $region47: #{tpu_custom_call.1} parent=5 // pred_region
        %s877 = ssub.s32 %s14, 2
        // Predicated region
        $region49: #{tpu_custom_call.1} parent=47 // pred_check
          %p878 = pneg %p153
        $region50: #{tpu_custom_call.1} parent=47 // pred_check_branch
          %880 = sbr.rel (%p878) target = $region52
        $region51: #{tpu_custom_call.1} parent=47 // pred_region
          %s881 = sand.u32 %s138, 1
          %s882 = scalar_lea.sflag [#allocation3], %s881
          %s883 = sand.u32 %s138, 1
          %s884 = smul.addr %s883, 256
          %s885 = scalar_lea.vmem [#allocation2], %s884
          %887 = dma.done %s882, 4096
        $region52: #{tpu_custom_call.1} parent=47 // pred_fallthru
          _
      $region48: #{tpu_custom_call.1} parent=5 // pred_fallthru
        _
    $region6: #{tpu_custom_call.1} parent=1 // loop_footer
      %s18 = sadd.s32 1, %s14
    $region7: #{tpu_custom_call.1} parent=1 // loop_footer_branch
      %13 = sbr.rel target = $region3
    $region8: #{tpu_custom_call.1} parent=1 // loop_exit
      _
    %888 = vsyncpa [#allocation3], 1
    %s889 = scalar_lea.sflag [#allocation3], 1
    %890 = vsyncpa %s889, 1

</llo_original>
